<compile_context>
chip_gen: v6e
topology: v6e:2x2x1
jax: 0.10.0
libtpu: 0.0.40
codegen_flags: <defaults>
</compile_context>

<pallas_src>
import jax
import jax.numpy as jnp
from jax.experimental import pallas as pl

# ---------------- static hyper-parameters ----------------
VOCAB        = 50
EMB_DIM      = 16            # W
SEQ_LEN      = 12            # H
BATCH        = 2
FEATURE_MAPS = 8
KSIZE        = 3
SPP_LEVELS   = (1, 2)
OUT_DIM      = 32

HO = SEQ_LEN - KSIZE + 1     # 10
WO = EMB_DIM - KSIZE + 1     # 14
KK = KSIZE * KSIZE           # 9
SPP_DIM = FEATURE_MAPS * sum(n * n for n in SPP_LEVELS)   # 40

LEVEL_OFFSETS = []
_off = 0
for _n in SPP_LEVELS:
    LEVEL_OFFSETS.append(_off)
    _off += FEATURE_MAPS * _n * _n

# Finest SPP level.  The kernel's fast pooling path requires the conv output to
# divide evenly into the finest-level bins (true here: 10/2, 14/2).  For
# non-divisible sizes the masked `_bin` path would be needed instead.
NBIN = SPP_LEVELS[-1]
assert SPP_LEVELS == (1, 2)
assert HO % NBIN == 0 and WO % NBIN == 0
HB = HO // NBIN              # 5
WB = WO // NBIN              # 7
BIN_ROWS = HB * WB           # 35


def _bin(idx, total, n):
    """PyTorch adaptive_max_pool2d bin boundaries (static)."""
    start = (idx * total) // n
    end = -((-(idx + 1) * total) // n)     # ceil
    return start, end


# Permutation mapping the kernel's pooled-feature order
#   [level-1 (F) | bin(0,0) (F) | bin(0,1) (F) | bin(1,0) (F) | bin(1,1) (F)]
# onto the reference (PyTorch) SPP order  LEVEL_OFFSETS[l] + f*n*n + i*n + j.
_PERM = []
for _li, _nl in enumerate(SPP_LEVELS):
    for _i in range(_nl):
        for _j in range(_nl):
            for _f in range(FEATURE_MAPS):
                _PERM.append(LEVEL_OFFSETS[_li] + _f * _nl * _nl + _i * _nl + _j)
_PERM = tuple(_PERM)


def _scnn_kernel(patches_ref, cw_ref, cb_ref, fcw_ref, fcb_ref, out_ref):
    # patches_ref: (B*HO*WO, K*K)   rows grouped as (b, i_bin, j_bin, h_loc, w_loc)
    # cw_ref:      (K*K, F)
    # cb_ref:      (1, F)
    # fcw_ref:     (SPP_DIM, OUT_DIM)  rows pre-permuted to the kernel pooled order
    # fcb_ref:     (1, OUT_DIM)
    # out_ref:     (BATCH, OUT_DIM)
    conv = jnp.dot(patches_ref[...], cw_ref[...],
                   preferred_element_type=jnp.float32)          # [B*HO*WO, F]  (MXU)
    conv = jnp.maximum(conv + cb_ref[...], 0.0)                 # bias + ReLU   (VPU)

    rows = []
    for b in range(BATCH):
        # Finest-level (2x2) bins: contiguous BIN_ROWS row blocks of `conv`.
        bins = []
        for i in range(NBIN):
            for j in range(NBIN):
                g = (b * NBIN + i) * NBIN + j
                blk = conv[g * BIN_ROWS:(g + 1) * BIN_ROWS, :]  # [BIN_ROWS, F]
                bins.append(jnp.max(blk, axis=0, keepdims=True))  # [1, F]
        # Level-1 (global) max == max over the partitioning 2x2 bins (exact).
        lvl1 = jnp.maximum(jnp.maximum(bins[0], bins[1]),
                           jnp.maximum(bins[2], bins[3]))
        rows.append(jnp.concatenate([lvl1] + bins, axis=1))     # [1, SPP_DIM]
    pooled = jnp.concatenate(rows, axis=0)                      # [BATCH, SPP_DIM]

    out_ref[...] = (jnp.dot(pooled, fcw_ref[...],
                            preferred_element_type=jnp.float32)  # fused FC (MXU)
                    + fcb_ref[...])


@jax.jit
def patient_simi_eval(codes, emb_table, conv_w, conv_b, fc_w, fc_b):
    # Embedding lookup (frozen word2vec) is glue -> plain JAX gather.
    embs = emb_table[codes].astype(jnp.float32)                  # [B, S, E]

    # im2col (glue): patches[b, h, w, ki*K + kj] = embs[b, h + ki, w + kj].
    patches = jnp.stack(
        [embs[:, ki:ki + HO, kj:kj + WO]
         for ki in range(KSIZE) for kj in range(KSIZE)], axis=-1)  # [B, HO, WO, KK]

    # Reorder conv-output rows so each finest-level SPP bin is contiguous:
    # row = (((b*NBIN + i)*NBIN + j)*HB + h_loc)*WB + w_loc.
    p = patches.reshape(BATCH, NBIN, HB, NBIN, WB, KK)
    p = jnp.transpose(p, (0, 1, 3, 2, 4, 5))                     # [B, i, j, hl, wl, KK]
    patches_rows = p.reshape(BATCH * HO * WO, KK)

    cw = conv_w.reshape(FEATURE_MAPS, KK).T.astype(jnp.float32)  # [KK, F]
    cb = conv_b.reshape(1, FEATURE_MAPS).astype(jnp.float32)
    fcw = fc_w[jnp.asarray(_PERM, jnp.int32)].astype(jnp.float32)  # [SPP_DIM, OUT_DIM]
    fcb = fc_b.reshape(1, OUT_DIM).astype(jnp.float32)

    return pl.pallas_call(
        _scnn_kernel,
        out_shape=jax.ShapeDtypeStruct((BATCH, OUT_DIM), jnp.float32),
        grid=(1,),   # whole batch in a single grid step
        in_specs=[
            pl.BlockSpec((BATCH * HO * WO, KK), lambda i: (0, 0)),
            pl.BlockSpec((KK, FEATURE_MAPS), lambda i: (0, 0)),
            pl.BlockSpec((1, FEATURE_MAPS), lambda i: (0, 0)),
            pl.BlockSpec((SPP_DIM, OUT_DIM), lambda i: (0, 0)),
            pl.BlockSpec((1, OUT_DIM), lambda i: (0, 0)),
        ],
        out_specs=pl.BlockSpec((BATCH, OUT_DIM), lambda i: (0, 0)),
    )(patches_rows, cw, cb, fcw, fcb)


def _reference(embs, conv_w, conv_b, fc_w, fc_b):
    """Pure-JAX reference matching the PyTorch semantics."""
    outs = []
    for b in range(BATCH):
        x = embs[b]
        chans = []
        for f in range(FEATURE_MAPS):
            acc = jnp.zeros((HO, WO), jnp.float32)
            for ki in range(KSIZE):
                for kj in range(KSIZE):
                    acc = acc + x[ki:ki + HO, kj:kj + WO] * conv_w[f, ki, kj]
            chans.append(jnp.maximum(acc + conv_b[f], 0.0))
        pooled = [None] * SPP_DIM
        for li, n in enumerate(SPP_LEVELS):
            for f in range(FEATURE_MAPS):
                for i in range(n):
                    hs, he = _bin(i, HO, n)
                    for j in range(n):
                        ws, we = _bin(j, WO, n)
                        pooled[LEVEL_OFFSETS[li] + f * n * n + i * n + j] = (
                            jnp.max(chans[f][hs:he, ws:we]))
        pooled = jnp.stack(pooled)                               # [SPP_DIM]
        outs.append((pooled[:, None] * fc_w).sum(axis=0) + fc_b)
    return jnp.stack(outs)


if __name__ == "__main__":
    key = jax.random.PRNGKey(0)
    k_emb, k_cw, k_cb, k_fw, k_fb, k_codes = jax.random.split(key, 6)

    emb_table = jax.random.normal(k_emb, (VOCAB, EMB_DIM), jnp.float32) * 0.5
    conv_w = jax.random.normal(k_cw, (FEATURE_MAPS, KSIZE, KSIZE), jnp.float32) * 0.2
    conv_b = jax.random.normal(k_cb, (FEATURE_MAPS,), jnp.float32) * 0.1
    fc_w = jax.random.normal(k_fw, (SPP_DIM, OUT_DIM), jnp.float32) * 0.1
    fc_b = jax.random.normal(k_fb, (OUT_DIM,), jnp.float32) * 0.1

    codes = jax.random.randint(k_codes, (BATCH, SEQ_LEN), 0, VOCAB, jnp.int32)

    out = patient_simi_eval(codes, emb_table, conv_w, conv_b, fc_w, fc_b)
    out = jax.block_until_ready(out)

    ref = _reference(emb_table[codes].astype(jnp.float32),
                     conv_w, conv_b, fc_w, fc_b)
    assert out.shape == (BATCH, OUT_DIM), out.shape
    # Loose-ish tolerance: kernel matmuls run on the MXU whose f32 multiply
    # path may differ slightly from the elementwise-accumulated reference.
    assert jnp.allclose(out, ref, atol=2e-2, rtol=2e-2), (out, ref)

    print("KERNEL_OK")
</pallas_src>

<mosaic_0001>
module attributes {stable_mosaic.version = 11 : i64} {
  func.func @_scnn_kernel(%arg0: i32, %arg1: memref<280x9xf32, #tpu.memory_space<vmem>>, %arg2: memref<9x8xf32, #tpu.memory_space<vmem>>, %arg3: memref<1x8xf32, #tpu.memory_space<vmem>>, %arg4: memref<40x32xf32, #tpu.memory_space<vmem>>, %arg5: memref<1x32xf32, #tpu.memory_space<vmem>>, %arg6: memref<2x32xf32, #tpu.memory_space<vmem>>) attributes {dimension_semantics = [#tpu.dimension_semantics<arbitrary>], iteration_bounds = array<i64: 1>, scalar_prefetch = 0 : i64, scratch_operands = 0 : i64, tpu.core_type = #tpu.core_type<tc>, window_params = [{pipeline_mode = #tpu.pipeline_mode<synchronous>, transform_indices = @transform_0, window_bounds = array<i64: 280, 9>}, {pipeline_mode = #tpu.pipeline_mode<synchronous>, transform_indices = @transform_1, window_bounds = array<i64: 9, 8>}, {pipeline_mode = #tpu.pipeline_mode<synchronous>, transform_indices = @transform_2, window_bounds = array<i64: 1, 8>}, {pipeline_mode = #tpu.pipeline_mode<synchronous>, transform_indices = @transform_3, window_bounds = array<i64: 40, 32>}, {pipeline_mode = #tpu.pipeline_mode<synchronous>, transform_indices = @transform_4, window_bounds = array<i64: 1, 32>}, {pipeline_mode = #tpu.pipeline_mode<synchronous>, transform_indices = @transform_5, window_bounds = array<i64: 2, 32>}]} {
    %c0 = arith.constant 0 : index
    %c0_0 = arith.constant 0 : index
    %0 = vector.load %arg1[%c0, %c0_0] : memref<280x9xf32, #tpu.memory_space<vmem>>, vector<280x9xf32>
    %c0_1 = arith.constant 0 : index
    %c0_2 = arith.constant 0 : index
    %1 = vector.load %arg2[%c0_1, %c0_2] : memref<9x8xf32, #tpu.memory_space<vmem>>, vector<9x8xf32>
    %cst = arith.constant dense<0.000000e+00> : vector<280x8xf32>
    %2 = tpu.matmul %0, %1, %cst {dimension_numbers = #tpu.dot_dimension_numbers<[1], [0], [0], [1], [0, 0, 1, 1], [], []>} : vector<280x9xf32>, vector<9x8xf32>, vector<280x8xf32> -> vector<280x8xf32>
    %c0_3 = arith.constant 0 : index
    %c0_4 = arith.constant 0 : index
    %3 = vector.load %arg3[%c0_3, %c0_4] : memref<1x8xf32, #tpu.memory_space<vmem>>, vector<1x8xf32>
    %4 = vector.broadcast %3 : vector<1x8xf32> to vector<280x8xf32>
    %5 = arith.addf %2, %4 : vector<280x8xf32>
    %cst_5 = arith.constant 0.000000e+00 : f32
    %6 = vector.broadcast %cst_5 : f32 to vector<280x8xf32>
    %7 = arith.maximumf %5, %6 : vector<280x8xf32>
    %8 = vector.extract_strided_slice %7 {offsets = [0, 0], sizes = [35, 8], strides = [1, 1]} : vector<280x8xf32> to vector<35x8xf32>
    %cst_6 = arith.constant dense<0xFF800000> : vector<8xf32>
    %9 = vector.multi_reduction <maximumf>, %8, %cst_6 [0] : vector<35x8xf32> to vector<8xf32>
    %10 = vector.shape_cast %9 : vector<8xf32> to vector<1x8xf32>
    %11 = vector.extract_strided_slice %7 {offsets = [35, 0], sizes = [35, 8], strides = [1, 1]} : vector<280x8xf32> to vector<35x8xf32>
    %cst_7 = arith.constant dense<0xFF800000> : vector<8xf32>
    %12 = vector.multi_reduction <maximumf>, %11, %cst_7 [0] : vector<35x8xf32> to vector<8xf32>
    %13 = vector.shape_cast %12 : vector<8xf32> to vector<1x8xf32>
    %14 = vector.extract_strided_slice %7 {offsets = [70, 0], sizes = [35, 8], strides = [1, 1]} : vector<280x8xf32> to vector<35x8xf32>
    %cst_8 = arith.constant dense<0xFF800000> : vector<8xf32>
    %15 = vector.multi_reduction <maximumf>, %14, %cst_8 [0] : vector<35x8xf32> to vector<8xf32>
    %16 = vector.shape_cast %15 : vector<8xf32> to vector<1x8xf32>
    %17 = vector.extract_strided_slice %7 {offsets = [105, 0], sizes = [35, 8], strides = [1, 1]} : vector<280x8xf32> to vector<35x8xf32>
    %cst_9 = arith.constant dense<0xFF800000> : vector<8xf32>
    %18 = vector.multi_reduction <maximumf>, %17, %cst_9 [0] : vector<35x8xf32> to vector<8xf32>
    %19 = vector.shape_cast %18 : vector<8xf32> to vector<1x8xf32>
    %20 = arith.maximumf %10, %13 : vector<1x8xf32>
    %21 = arith.maximumf %16, %19 : vector<1x8xf32>
    %22 = arith.maximumf %20, %21 : vector<1x8xf32>
    %23 = tpu.concatenate %22, %10, %13, %16, %19 in 1 : vector<1x8xf32>, vector<1x8xf32>, vector<1x8xf32>, vector<1x8xf32>, vector<1x8xf32> -> vector<1x40xf32>
    %24 = vector.extract_strided_slice %7 {offsets = [140, 0], sizes = [35, 8], strides = [1, 1]} : vector<280x8xf32> to vector<35x8xf32>
    %cst_10 = arith.constant dense<0xFF800000> : vector<8xf32>
    %25 = vector.multi_reduction <maximumf>, %24, %cst_10 [0] : vector<35x8xf32> to vector<8xf32>
    %26 = vector.shape_cast %25 : vector<8xf32> to vector<1x8xf32>
    %27 = vector.extract_strided_slice %7 {offsets = [175, 0], sizes = [35, 8], strides = [1, 1]} : vector<280x8xf32> to vector<35x8xf32>
    %cst_11 = arith.constant dense<0xFF800000> : vector<8xf32>
    %28 = vector.multi_reduction <maximumf>, %27, %cst_11 [0] : vector<35x8xf32> to vector<8xf32>
    %29 = vector.shape_cast %28 : vector<8xf32> to vector<1x8xf32>
    %30 = vector.extract_strided_slice %7 {offsets = [210, 0], sizes = [35, 8], strides = [1, 1]} : vector<280x8xf32> to vector<35x8xf32>
    %cst_12 = arith.constant dense<0xFF800000> : vector<8xf32>
    %31 = vector.multi_reduction <maximumf>, %30, %cst_12 [0] : vector<35x8xf32> to vector<8xf32>
    %32 = vector.shape_cast %31 : vector<8xf32> to vector<1x8xf32>
    %33 = vector.extract_strided_slice %7 {offsets = [245, 0], sizes = [35, 8], strides = [1, 1]} : vector<280x8xf32> to vector<35x8xf32>
    %cst_13 = arith.constant dense<0xFF800000> : vector<8xf32>
    %34 = vector.multi_reduction <maximumf>, %33, %cst_13 [0] : vector<35x8xf32> to vector<8xf32>
    %35 = vector.shape_cast %34 : vector<8xf32> to vector<1x8xf32>
    %36 = arith.maximumf %26, %29 : vector<1x8xf32>
    %37 = arith.maximumf %32, %35 : vector<1x8xf32>
    %38 = arith.maximumf %36, %37 : vector<1x8xf32>
    %39 = tpu.concatenate %38, %26, %29, %32, %35 in 1 : vector<1x8xf32>, vector<1x8xf32>, vector<1x8xf32>, vector<1x8xf32>, vector<1x8xf32> -> vector<1x40xf32>
    %40 = tpu.concatenate %23, %39 in 0 : vector<1x40xf32>, vector<1x40xf32> -> vector<2x40xf32>
    %c0_14 = arith.constant 0 : index
    %c0_15 = arith.constant 0 : index
    %41 = vector.load %arg4[%c0_14, %c0_15] : memref<40x32xf32, #tpu.memory_space<vmem>>, vector<40x32xf32>
    %cst_16 = arith.constant dense<0.000000e+00> : vector<2x32xf32>
    %42 = tpu.matmul %40, %41, %cst_16 {dimension_numbers = #tpu.dot_dimension_numbers<[1], [0], [0], [1], [0, 0, 1, 1], [], []>} : vector<2x40xf32>, vector<40x32xf32>, vector<2x32xf32> -> vector<2x32xf32>
    %c0_17 = arith.constant 0 : index
    %c0_18 = arith.constant 0 : index
    %43 = vector.load %arg5[%c0_17, %c0_18] : memref<1x32xf32, #tpu.memory_space<vmem>>, vector<1x32xf32>
    %44 = vector.broadcast %43 : vector<1x32xf32> to vector<2x32xf32>
    %45 = arith.addf %42, %44 : vector<2x32xf32>
    %c0_19 = arith.constant 0 : index
    %c0_20 = arith.constant 0 : index
    %46 = vector.load %arg6[%c0_19, %c0_20] : memref<2x32xf32, #tpu.memory_space<vmem>>, vector<2x32xf32>
    tpu.vector_store %arg6[%c0_19, %c0_20], %45 {strides = array<i32>} : memref<2x32xf32, #tpu.memory_space<vmem>>, vector<2x32xf32>,
    return
  }
  func.func @transform_0(%arg0: i32) -> (i32, i32) {
    %c0_i32 = arith.constant 0 : i32
    %c0_i32_0 = arith.constant 0 : i32
    %c0_i32_1 = arith.constant 0 : i32
    return %c0_i32, %c0_i32_0 : i32, i32
  }
  func.func @transform_1(%arg0: i32) -> (i32, i32) {
    %c0_i32 = arith.constant 0 : i32
    %c0_i32_0 = arith.constant 0 : i32
    %c0_i32_1 = arith.constant 0 : i32
    return %c0_i32, %c0_i32_0 : i32, i32
  }
  func.func @transform_2(%arg0: i32) -> (i32, i32) {
    %c0_i32 = arith.constant 0 : i32
    %c0_i32_0 = arith.constant 0 : i32
    %c0_i32_1 = arith.constant 0 : i32
    return %c0_i32, %c0_i32_0 : i32, i32
  }
  func.func @transform_3(%arg0: i32) -> (i32, i32) {
    %c0_i32 = arith.constant 0 : i32
    %c0_i32_0 = arith.constant 0 : i32
    %c0_i32_1 = arith.constant 0 : i32
    return %c0_i32, %c0_i32_0 : i32, i32
  }
  func.func @transform_4(%arg0: i32) -> (i32, i32) {
    %c0_i32 = arith.constant 0 : i32
    %c0_i32_0 = arith.constant 0 : i32
    %c0_i32_1 = arith.constant 0 : i32
    return %c0_i32, %c0_i32_0 : i32, i32
  }
  func.func @transform_5(%arg0: i32) -> (i32, i32) {
    %c0_i32 = arith.constant 0 : i32
    %c0_i32_0 = arith.constant 0 : i32
    %c0_i32_1 = arith.constant 0 : i32
    return %c0_i32, %c0_i32_0 : i32, i32
  }
}

</mosaic_0001>

<llo_original>
// kernel: patient_simi_eval.1
$region0: #{patient_simi_eval.1}
  #allocation0 [shape = 'u32[]', space=smem, size = 0x4, offset = 0x4, fixed_abs, tag = 'smem constant byte address 0x4 - core index']
  #allocation1 [shape = 'u32[144,128]{1,0:T(1,128)}', space=vmem, size = 0x12000, scoped, tag = 'internal scratch']
  %s0 = inlined_call_operand.vmem [shape: f32[280,9], index: 0, kind: input, shape index: {}]
  %s1 = inlined_call_operand.vmem [shape: f32[9,8], index: 1, kind: input, shape index: {}]
  %s2 = inlined_call_operand.vmem [shape: f32[1,8], index: 2, kind: input, shape index: {}]
  %s3 = inlined_call_operand.vmem [shape: f32[40,32], index: 3, kind: input, shape index: {}]
  %s4 = inlined_call_operand.vmem [shape: f32[1,32], index: 4, kind: input, shape index: {}]
  %s5 = inlined_call_operand.hbm [shape: f32[2,32], index: 5, kind: output, shape index: {}]
  %s6 = sld [smem:[#allocation0]]
  $region30: #{patient_simi_eval.1} parent=0
    _
  %s8 = ssub.s32 1, %s6
  %s9 = scalar_select 0, %s8, %s6
  $region1: #{patient_simi_eval.1} parent=0
    #allocation2 [shape = 'u8[1024]{0}', space=vmem, size = 0x400, scoped, tag = 'output window, operand 0, single buffered']
    #allocation3 [shape = 's32[1]{0}', space=sflag, size = 0x4, scoped, tag = 'scoped memory for patient_simi_eval.1']
    %10 = vsyncpa [#allocation3], 0
    // Predicated region
    $region2: #{patient_simi_eval.1} parent=1 // pred_check
      _
    $region3: #{patient_simi_eval.1} parent=1 // pred_check_branch
      %12 = sbr.rel (0) target = $region5
    $region4: #{patient_simi_eval.1} parent=1 // pred_region
      _
    $region5: #{patient_simi_eval.1} parent=1 // pred_fallthru
      _
    // Predicated region
    $region6: #{patient_simi_eval.1} parent=1 // pred_check
      _
    $region7: #{patient_simi_eval.1} parent=1 // pred_check_branch
      %14 = sbr.rel (0) target = $region9
    $region8: #{patient_simi_eval.1} parent=1 // pred_region
      _
    $region9: #{patient_simi_eval.1} parent=1 // pred_fallthru
      _
    // Predicated region
    $region10: #{patient_simi_eval.1} parent=1 // pred_check
      _
    $region11: #{patient_simi_eval.1} parent=1 // pred_check_branch
      %16 = sbr.rel (0) target = $region13
    $region12: #{patient_simi_eval.1} parent=1 // pred_region
      _
    $region13: #{patient_simi_eval.1} parent=1 // pred_fallthru
      _
    // Predicated region
    $region14: #{patient_simi_eval.1} parent=1 // pred_check
      _
    $region15: #{patient_simi_eval.1} parent=1 // pred_check_branch
      %18 = sbr.rel (0) target = $region17
    $region16: #{patient_simi_eval.1} parent=1 // pred_region
      _
    $region17: #{patient_simi_eval.1} parent=1 // pred_fallthru
      _
    // Predicated region
    $region18: #{patient_simi_eval.1} parent=1 // pred_check
      _
    $region19: #{patient_simi_eval.1} parent=1 // pred_check_branch
      %20 = sbr.rel (0) target = $region21
    $region20: #{patient_simi_eval.1} parent=1 // pred_region
      _
    $region21: #{patient_simi_eval.1} parent=1 // pred_fallthru
      _
    %v21 = vld [vmem:[%s0] sm:$0xff]
    %v22 = vld [vmem:[%s0 + $0x8] sm:$0xff]
    %v23 = vld [vmem:[%s0 + $0x10] sm:$0xff]
    %v24 = vld [vmem:[%s0 + $0x18] sm:$0xff]
    %v25 = vld [vmem:[%s0 + $0x20] sm:$0xff]
    %v26 = vld [vmem:[%s0 + $0x28] sm:$0xff]
    %v27 = vld [vmem:[%s0 + $0x30] sm:$0xff]
    %v28 = vld [vmem:[%s0 + $0x38] sm:$0xff]
    %v29 = vld [vmem:[%s0 + $0x40] sm:$0xff]
    %v30 = vld [vmem:[%s0 + $0x48] sm:$0xff]
    %v31 = vld [vmem:[%s0 + $0x50] sm:$0xff]
    %v32 = vld [vmem:[%s0 + $0x58] sm:$0xff]
    %v33 = vld [vmem:[%s0 + $0x60] sm:$0xff]
    %v34 = vld [vmem:[%s0 + $0x68] sm:$0xff]
    %v35 = vld [vmem:[%s0 + $0x70] sm:$0xff]
    %v36 = vld [vmem:[%s0 + $0x78] sm:$0xff]
    %v37 = vld [vmem:[%s0 + $0x80] sm:$0xff]
    %v38 = vld [vmem:[%s0 + $0x88] sm:$0xff]
    %v39 = vld [vmem:[%s0 + $0x90] sm:$0xff]
    %v40 = vld [vmem:[%s0 + $0x98] sm:$0xff]
    %v41 = vld [vmem:[%s0 + $0xa0] sm:$0xff]
    %v42 = vld [vmem:[%s0 + $0xa8] sm:$0xff]
    %v43 = vld [vmem:[%s0 + $0xb0] sm:$0xff]
    %v44 = vld [vmem:[%s0 + $0xb8] sm:$0xff]
    %v45 = vld [vmem:[%s0 + $0xc0] sm:$0xff]
    %v46 = vld [vmem:[%s0 + $0xc8] sm:$0xff]
    %v47 = vld [vmem:[%s0 + $0xd0] sm:$0xff]
    %v48 = vld [vmem:[%s0 + $0xd8] sm:$0xff]
    %v49 = vld [vmem:[%s0 + $0xe0] sm:$0xff]
    %v50 = vld [vmem:[%s0 + $0xe8] sm:$0xff]
    %v51 = vld [vmem:[%s0 + $0xf0] sm:$0xff]
    %v52 = vld [vmem:[%s0 + $0xf8] sm:$0xff]
    %v53 = vld [vmem:[%s0 + $0x100] sm:$0xff]
    %v54 = vld [vmem:[%s0 + $0x108] sm:$0xff]
    %v55 = vld [vmem:[%s0 + $0x110] sm:$0xff]
    %v56 = vld [vmem:[%s1] sm:$0xff]
    %v57 = vld [vmem:[%s1 + $0x8] sm:$0x1]
    %v58 = vld [vmem:[%s2] sm:$0x1]
    %v60 = vlaneseq
    %v61 = vshrl.u32 %v60, 7
    %v62 = vsub.s32 0, %v61
    %v63 = vrot.slane %v58, %v62
    %vm65 = vcmask 72704
    %v67 = vsel %vm65, %v21, 0
    %v70 = vsel %vm65, %v22, 0
    %v73 = vsel %vm65, %v23, 0
    %v76 = vsel %vm65, %v24, 0
    %v79 = vsel %vm65, %v25, 0
    %v82 = vsel %vm65, %v26, 0
    %v85 = vsel %vm65, %v27, 0
    %v88 = vsel %vm65, %v28, 0
    %v91 = vsel %vm65, %v29, 0
    %v94 = vsel %vm65, %v30, 0
    %v97 = vsel %vm65, %v31, 0
    %v100 = vsel %vm65, %v32, 0
    %v103 = vsel %vm65, %v33, 0
    %v106 = vsel %vm65, %v34, 0
    %v109 = vsel %vm65, %v35, 0
    %v112 = vsel %vm65, %v36, 0
    %v115 = vsel %vm65, %v37, 0
    %v118 = vsel %vm65, %v38, 0
    %v121 = vsel %vm65, %v39, 0
    %v124 = vsel %vm65, %v40, 0
    %v127 = vsel %vm65, %v41, 0
    %v130 = vsel %vm65, %v42, 0
    %v133 = vsel %vm65, %v43, 0
    %v136 = vsel %vm65, %v44, 0
    %v139 = vsel %vm65, %v45, 0
    %v142 = vsel %vm65, %v46, 0
    %v145 = vsel %vm65, %v47, 0
    %v148 = vsel %vm65, %v48, 0
    %v151 = vsel %vm65, %v49, 0
    %v154 = vsel %vm65, %v50, 0
    %v157 = vsel %vm65, %v51, 0
    %v160 = vsel %vm65, %v52, 0
    %v163 = vsel %vm65, %v53, 0
    %v166 = vsel %vm65, %v54, 0
    %v169 = vsel %vm65, %v55, 0
    %vm171 = vcmask 1040384
    %v173 = vsel %vm171, %v57, 0
    %175 = vmatprep.subr.mxu0 0.0
    %176 = vmatpush1.msra.mxu0 0.0
    %177 = vmatprep.subr.mxu0 0.0
    %178 = vmatpush1.msra.mxu0 0.0
    %179 = vmatprep.subr.mxu0 0.0
    %180 = vmatpush1.msra.mxu0 0.0
    %181 = vmatprep.subr.mxu0 0.0
    %182 = vmatpush1.msra.mxu0 0.0
    %183 = vmatprep.subr.mxu0 0.0
    %184 = vmatpush1.msra.mxu0 0.0
    %185 = vmatprep.subr.mxu0 0.0
    %186 = vmatpush1.msra.mxu0 0.0
    %187 = vmatprep.subr.mxu0 0.0
    %188 = vmatpush1.msra.mxu0 0.0
    %189 = vmatprep.subr.mxu0 0.0
    %190 = vmatpush1.msra.mxu0 0.0
    %191 = vmatprep.subr.mxu0 0.0
    %192 = vmatpush1.msra.mxu0 0.0
    %193 = vmatprep.subr.mxu0 0.0
    %194 = vmatpush1.msra.mxu0 0.0
    %195 = vmatprep.subr.mxu0 0.0
    %196 = vmatpush1.msra.mxu0 0.0
    %197 = vmatprep.subr.mxu0 0.0
    %198 = vmatpush1.msra.mxu0 0.0
    %199 = vmatprep.subr.mxu0 0.0
    %200 = vmatpush1.msra.mxu0 0.0
    %201 = vmatprep.subr.mxu0 0.0
    %202 = vmatpush1.msra.mxu0 0.0
    %203 = vmatprep.subr.mxu0 0.0
    %204 = vmatpush1.msra.mxu0 %v173
    %205 = vmatprep.subr.mxu0 0.0
    %206 = vmatpush1.msra.mxu0 %v56
    %207 = vmatprep.subr.mxu0 0.0
    %208 = vmatpush2.msra.mxu0 0.0
    %209 = vmatprep.subr.mxu0 0.0
    %210 = vmatpush2.msra.mxu0 0.0
    %211 = vmatprep.subr.mxu0 0.0
    %212 = vmatpush2.msra.mxu0 0.0
    %213 = vmatprep.subr.mxu0 0.0
    %214 = vmatpush2.msra.mxu0 0.0
    %215 = vmatprep.subr.mxu0 0.0
    %216 = vmatpush2.msra.mxu0 0.0
    %217 = vmatprep.subr.mxu0 0.0
    %218 = vmatpush2.msra.mxu0 0.0
    %219 = vmatprep.subr.mxu0 0.0
    %220 = vmatpush2.msra.mxu0 0.0
    %221 = vmatprep.subr.mxu0 0.0
    %222 = vmatpush2.msra.mxu0 0.0
    %223 = vmatprep.subr.mxu0 0.0
    %224 = vmatpush2.msra.mxu0 0.0
    %225 = vmatprep.subr.mxu0 0.0
    %226 = vmatpush2.msra.mxu0 0.0
    %227 = vmatprep.subr.mxu0 0.0
    %228 = vmatpush2.msra.mxu0 0.0
    %229 = vmatprep.subr.mxu0 0.0
    %230 = vmatpush2.msra.mxu0 0.0
    %231 = vmatprep.subr.mxu0 0.0
    %232 = vmatpush2.msra.mxu0 0.0
    %233 = vmatprep.subr.mxu0 0.0
    %234 = vmatpush2.msra.mxu0 0.0
    %235 = vmatprep.subr.mxu0 0.0
    %236 = vmatpush2.msra.mxu0 0.0
    %237 = vmatprep.subr.mxu0 0.0
    %238 = vmatpush2.msra.mxu0 0.0
    %239 = vmatprep.mubr.f32.mxu0 0.0
    %240 = vmatmul.mubr.f32.gmra.mxu0 %v67
    %v241 = vpop.f32.mrf.mxu0
    %v242 = vadd.f32 %v63, %v241
    %v243 = vpop.f32.mrf.mxu0
    %244 = vmatprep.mubr.f32.mxu0 0.0
    %245 = vmatmul.mubr.f32.gmra.mxu0 %v70
    %v246 = vpop.f32.mrf.mxu0
    %v247 = vadd.f32 %v63, %v246
    %v248 = vpop.f32.mrf.mxu0
    %249 = vmatprep.mubr.f32.mxu0 0.0
    %250 = vmatmul.mubr.f32.gmra.mxu0 %v73
    %v251 = vpop.f32.mrf.mxu0
    %v252 = vadd.f32 %v63, %v251
    %v253 = vpop.f32.mrf.mxu0
    %254 = vmatprep.mubr.f32.mxu0 0.0
    %255 = vmatmul.mubr.f32.gmra.mxu0 %v76
    %v256 = vpop.f32.mrf.mxu0
    %v257 = vadd.f32 %v63, %v256
    %v258 = vpop.f32.mrf.mxu0
    %259 = vmatprep.mubr.f32.mxu0 0.0
    %260 = vmatmul.mubr.f32.gmra.mxu0 %v79
    %v261 = vpop.f32.mrf.mxu0
    %v262 = vadd.f32 %v63, %v261
    %v263 = vpop.f32.mrf.mxu0
    %264 = vmatprep.mubr.f32.mxu0 0.0
    %265 = vmatmul.mubr.f32.gmra.mxu0 %v82
    %v266 = vpop.f32.mrf.mxu0
    %v267 = vadd.f32 %v63, %v266
    %v268 = vpop.f32.mrf.mxu0
    %269 = vmatprep.mubr.f32.mxu0 0.0
    %270 = vmatmul.mubr.f32.gmra.mxu0 %v85
    %v271 = vpop.f32.mrf.mxu0
    %v272 = vadd.f32 %v63, %v271
    %v273 = vpop.f32.mrf.mxu0
    %274 = vmatprep.mubr.f32.mxu0 0.0
    %275 = vmatmul.mubr.f32.gmra.mxu0 %v88
    %v276 = vpop.f32.mrf.mxu0
    %v277 = vadd.f32 %v63, %v276
    %v278 = vpop.f32.mrf.mxu0
    %279 = vmatprep.mubr.f32.mxu0 0.0
    %280 = vmatmul.mubr.f32.gmra.mxu0 %v91
    %v281 = vpop.f32.mrf.mxu0
    %v282 = vadd.f32 %v63, %v281
    %v283 = vpop.f32.mrf.mxu0
    %284 = vmatprep.mubr.f32.mxu0 0.0
    %285 = vmatmul.mubr.f32.gmra.mxu0 %v94
    %v286 = vpop.f32.mrf.mxu0
    %v287 = vadd.f32 %v63, %v286
    %v288 = vpop.f32.mrf.mxu0
    %289 = vmatprep.mubr.f32.mxu0 0.0
    %290 = vmatmul.mubr.f32.gmra.mxu0 %v97
    %v291 = vpop.f32.mrf.mxu0
    %v292 = vadd.f32 %v63, %v291
    %v293 = vpop.f32.mrf.mxu0
    %294 = vmatprep.mubr.f32.mxu0 0.0
    %295 = vmatmul.mubr.f32.gmra.mxu0 %v100
    %v296 = vpop.f32.mrf.mxu0
    %v297 = vadd.f32 %v63, %v296
    %v298 = vpop.f32.mrf.mxu0
    %299 = vmatprep.mubr.f32.mxu0 0.0
    %300 = vmatmul.mubr.f32.gmra.mxu0 %v103
    %v301 = vpop.f32.mrf.mxu0
    %v302 = vadd.f32 %v63, %v301
    %v303 = vpop.f32.mrf.mxu0
    %304 = vmatprep.mubr.f32.mxu0 0.0
    %305 = vmatmul.mubr.f32.gmra.mxu0 %v106
    %v306 = vpop.f32.mrf.mxu0
    %v307 = vadd.f32 %v63, %v306
    %v308 = vpop.f32.mrf.mxu0
    %309 = vmatprep.mubr.f32.mxu0 0.0
    %310 = vmatmul.mubr.f32.gmra.mxu0 %v109
    %v311 = vpop.f32.mrf.mxu0
    %v312 = vadd.f32 %v63, %v311
    %v313 = vpop.f32.mrf.mxu0
    %314 = vmatprep.mubr.f32.mxu0 0.0
    %315 = vmatmul.mubr.f32.gmra.mxu0 %v112
    %v316 = vpop.f32.mrf.mxu0
    %v317 = vadd.f32 %v63, %v316
    %v318 = vpop.f32.mrf.mxu0
    %319 = vmatprep.mubr.f32.mxu0 0.0
    %320 = vmatmul.mubr.f32.gmra.mxu0 %v115
    %v321 = vpop.f32.mrf.mxu0
    %v322 = vadd.f32 %v63, %v321
    %v323 = vpop.f32.mrf.mxu0
    %324 = vmatprep.mubr.f32.mxu0 0.0
    %325 = vmatmul.mubr.f32.gmra.mxu0 %v118
    %v326 = vpop.f32.mrf.mxu0
    %v327 = vadd.f32 %v63, %v326
    %v328 = vpop.f32.mrf.mxu0
    %329 = vmatprep.mubr.f32.mxu0 0.0
    %330 = vmatmul.mubr.f32.gmra.mxu0 %v121
    %v331 = vpop.f32.mrf.mxu0
    %v332 = vadd.f32 %v63, %v331
    %v333 = vpop.f32.mrf.mxu0
    %334 = vmatprep.mubr.f32.mxu0 0.0
    %335 = vmatmul.mubr.f32.gmra.mxu0 %v124
    %v336 = vpop.f32.mrf.mxu0
    %v337 = vadd.f32 %v63, %v336
    %v338 = vpop.f32.mrf.mxu0
    %339 = vmatprep.mubr.f32.mxu0 0.0
    %340 = vmatmul.mubr.f32.gmra.mxu0 %v127
    %v341 = vpop.f32.mrf.mxu0
    %v342 = vadd.f32 %v63, %v341
    %v343 = vpop.f32.mrf.mxu0
    %344 = vmatprep.mubr.f32.mxu0 0.0
    %345 = vmatmul.mubr.f32.gmra.mxu0 %v130
    %v346 = vpop.f32.mrf.mxu0
    %v347 = vadd.f32 %v63, %v346
    %v348 = vpop.f32.mrf.mxu0
    %349 = vmatprep.mubr.f32.mxu0 0.0
    %350 = vmatmul.mubr.f32.gmra.mxu0 %v133
    %v351 = vpop.f32.mrf.mxu0
    %v352 = vadd.f32 %v63, %v351
    %v353 = vpop.f32.mrf.mxu0
    %354 = vmatprep.mubr.f32.mxu0 0.0
    %355 = vmatmul.mubr.f32.gmra.mxu0 %v136
    %v356 = vpop.f32.mrf.mxu0
    %v357 = vadd.f32 %v63, %v356
    %v358 = vpop.f32.mrf.mxu0
    %359 = vmatprep.mubr.f32.mxu0 0.0
    %360 = vmatmul.mubr.f32.gmra.mxu0 %v139
    %v361 = vpop.f32.mrf.mxu0
    %v362 = vadd.f32 %v63, %v361
    %v363 = vpop.f32.mrf.mxu0
    %364 = vmatprep.mubr.f32.mxu0 0.0
    %365 = vmatmul.mubr.f32.gmra.mxu0 %v142
    %v366 = vpop.f32.mrf.mxu0
    %v367 = vadd.f32 %v63, %v366
    %v368 = vpop.f32.mrf.mxu0
    %369 = vmatprep.mubr.f32.mxu0 0.0
    %370 = vmatmul.mubr.f32.gmra.mxu0 %v145
    %v371 = vpop.f32.mrf.mxu0
    %v372 = vadd.f32 %v63, %v371
    %v373 = vpop.f32.mrf.mxu0
    %374 = vmatprep.mubr.f32.mxu0 0.0
    %375 = vmatmul.mubr.f32.gmra.mxu0 %v148
    %v376 = vpop.f32.mrf.mxu0
    %v377 = vadd.f32 %v63, %v376
    %v378 = vpop.f32.mrf.mxu0
    %379 = vmatprep.mubr.f32.mxu0 0.0
    %380 = vmatmul.mubr.f32.gmra.mxu0 %v151
    %v381 = vpop.f32.mrf.mxu0
    %v382 = vadd.f32 %v63, %v381
    %v383 = vpop.f32.mrf.mxu0
    %384 = vmatprep.mubr.f32.mxu0 0.0
    %385 = vmatmul.mubr.f32.gmra.mxu0 %v154
    %v386 = vpop.f32.mrf.mxu0
    %v387 = vadd.f32 %v63, %v386
    %v388 = vpop.f32.mrf.mxu0
    %389 = vmatprep.mubr.f32.mxu0 0.0
    %390 = vmatmul.mubr.f32.gmra.mxu0 %v157
    %v391 = vpop.f32.mrf.mxu0
    %v392 = vadd.f32 %v63, %v391
    %v393 = vpop.f32.mrf.mxu0
    %394 = vmatprep.mubr.f32.mxu0 0.0
    %395 = vmatmul.mubr.f32.gmra.mxu0 %v160
    %v396 = vpop.f32.mrf.mxu0
    %v397 = vadd.f32 %v63, %v396
    %v398 = vpop.f32.mrf.mxu0
    %399 = vmatprep.mubr.f32.mxu0 0.0
    %400 = vmatmul.mubr.f32.gmra.mxu0 %v163
    %v401 = vpop.f32.mrf.mxu0
    %v402 = vadd.f32 %v63, %v401
    %v403 = vpop.f32.mrf.mxu0
    %404 = vmatprep.mubr.f32.mxu0 0.0
    %405 = vmatmul.mubr.f32.gmra.mxu0 %v166
    %v406 = vpop.f32.mrf.mxu0
    %v407 = vadd.f32 %v63, %v406
    %v408 = vpop.f32.mrf.mxu0
    %409 = vmatprep.mubr.f32.mxu0 0.0
    %410 = vmatmul.mubr.f32.gmra.mxu0 %v169
    %v411 = vpop.f32.mrf.mxu0
    %v412 = vadd.f32 %v63, %v411
    %v413 = vpop.f32.mrf.mxu0
    %414 = vdwg.mxu0
    %v415 = vmax.f32 %v242, 0.0
    %v416 = vmax.f32 %v247, 0.0
    %v417 = vmax.f32 %v252, 0.0
    %v418 = vmax.f32 %v257, 0.0
    %v419 = vmax.f32 %v262, 0.0
    %v420 = vmax.f32 %v267, 0.0
    %v421 = vmax.f32 %v272, 0.0
    %v422 = vmax.f32 %v277, 0.0
    %v423 = vmax.f32 %v282, 0.0
    %v424 = vmax.f32 %v287, 0.0
    %v425 = vmax.f32 %v292, 0.0
    %v426 = vmax.f32 %v297, 0.0
    %v427 = vmax.f32 %v302, 0.0
    %v428 = vmax.f32 %v307, 0.0
    %v429 = vmax.f32 %v312, 0.0
    %v430 = vmax.f32 %v317, 0.0
    %v431 = vmax.f32 %v322, 0.0
    %v432 = vmax.f32 %v327, 0.0
    %v433 = vmax.f32 %v332, 0.0
    %v434 = vmax.f32 %v337, 0.0
    %v435 = vmax.f32 %v342, 0.0
    %v436 = vmax.f32 %v347, 0.0
    %v437 = vmax.f32 %v352, 0.0
    %v438 = vmax.f32 %v357, 0.0
    %v439 = vmax.f32 %v362, 0.0
    %v440 = vmax.f32 %v367, 0.0
    %v441 = vmax.f32 %v372, 0.0
    %v442 = vmax.f32 %v377, 0.0
    %v443 = vmax.f32 %v382, 0.0
    %v444 = vmax.f32 %v387, 0.0
    %v445 = vmax.f32 %v392, 0.0
    %v446 = vmax.f32 %v397, 0.0
    %v447 = vmax.f32 %v402, 0.0
    %v448 = vmax.f32 %v407, 0.0
    %v449 = vmax.f32 %v412, 0.0
    %vm450 = vcmask 64512
    %v451 = vsel %vm450, %v415, -inf
    %v452 = vsel %vm450, %v416, -inf
    %v453 = vsel %vm450, %v417, -inf
    %v454 = vsel %vm450, %v418, -inf
    %vm455 = vcmask 59392
    %v456 = vsel %vm455, %v419, -inf
    %v457 = vmax.f32 %v451, %v456
    %v458 = vmax.f32 %v457, %v452
    %v459 = vmax.f32 %v453, %v454
    %v460 = vmax.f32 %v458, %v459
    %v461 = vrot.slane %v460, 4
    %v462 = vmax.f32 %v460, %v461
    %v463 = vrot.slane %v462, 2
    %v464 = vmax.f32 %v462, %v463
    %v465 = vrot.slane %v464, 1
    %v466 = vmax.f32 %v464, %v465
    %vm467 = vcmask 64515
    %v468 = vsel %vm467, %v419, -inf
    %v469 = vsel %vm450, %v420, -inf
    %v470 = vsel %vm450, %v421, -inf
    %v471 = vsel %vm450, %v422, -inf
    %vm472 = vcmask 62464
    %v473 = vsel %vm472, %v423, -inf
    %v474 = vmax.f32 %v468, %v473
    %v475 = vmax.f32 %v474, %v469
    %v476 = vmax.f32 %v470, %v471
    %v477 = vmax.f32 %v475, %v476
    %v478 = vrot.slane %v477, 4
    %v479 = vmax.f32 %v477, %v478
    %v480 = vrot.slane %v479, 2
    %v481 = vmax.f32 %v479, %v480
    %v482 = vrot.slane %v481, 1
    %v483 = vmax.f32 %v481, %v482
    %vm484 = vcmask 64518
    %v485 = vsel %vm484, %v423, -inf
    %v486 = vsel %vm450, %v424, -inf
    %v487 = vsel %vm450, %v425, -inf
    %v488 = vsel %vm450, %v426, -inf
    %v489 = vsel %vm450, %v427, -inf
    %v490 = vmax.f32 %v485, %v489
    %vm491 = vcmask 57344
    %v492 = vsel %vm491, %v428, -inf
    %v493 = vmax.f32 %v486, %v492
    %v494 = vmax.f32 %v490, %v493
    %v495 = vmax.f32 %v487, %v488
    %v496 = vmax.f32 %v494, %v495
    %v497 = vrot.slane %v496, 4
    %v498 = vmax.f32 %v496, %v497
    %v499 = vrot.slane %v498, 2
    %v500 = vmax.f32 %v498, %v499
    %v501 = vrot.slane %v500, 1
    %v502 = vmax.f32 %v500, %v501
    %vm503 = vcmask 64513
    %v504 = vsel %vm503, %v428, -inf
    %v505 = vsel %vm450, %v429, -inf
    %v506 = vsel %vm450, %v430, -inf
    %v507 = vsel %vm450, %v431, -inf
    %vm508 = vcmask 60416
    %v509 = vsel %vm508, %v432, -inf
    %v510 = vmax.f32 %v504, %v509
    %v511 = vmax.f32 %v510, %v505
    %v512 = vmax.f32 %v506, %v507
    %v513 = vmax.f32 %v511, %v512
    %v514 = vrot.slane %v513, 4
    %v515 = vmax.f32 %v513, %v514
    %v516 = vrot.slane %v515, 2
    %v517 = vmax.f32 %v515, %v516
    %v518 = vrot.slane %v517, 1
    %v519 = vmax.f32 %v517, %v518
    %v520 = vmax.f32 %v466, %v483
    %v521 = vmax.f32 %v502, %v519
    %v522 = vmax.f32 %v520, %v521
    %524 = vrot.lane.b32.xlu0 %v466, 8
    %v525 = vpop.permute.xlu0 %524
    %528 = vrot.lane.b32.xlu0 %v483, 16
    %v529 = vpop.permute.xlu0 %528
    %532 = vrot.lane.b32.xlu0 %v502, 24
    %v533 = vpop.permute.xlu0 %532
    %536 = vrot.lane.b32.xlu0 %v519, 32
    %v537 = vpop.permute.xlu0 %536
    %v539 = vsel %vm450, %v522, %v525
    %vm540 = vcmask 130048
    %v541 = vsel %vm540, %v539, %v529
    %vm542 = vcmask 195584
    %v543 = vsel %vm542, %v541, %v533
    %vm544 = vcmask 261120
    %v545 = vsel %vm544, %v543, %v537
    %vm546 = vcmask 64516
    %v547 = vsel %vm546, %v432, -inf
    %v548 = vsel %vm450, %v433, -inf
    %v549 = vsel %vm450, %v434, -inf
    %v550 = vsel %vm450, %v435, -inf
    %vm551 = vcmask 63488
    %v552 = vsel %vm551, %v436, -inf
    %v553 = vmax.f32 %v547, %v552
    %v554 = vmax.f32 %v553, %v548
    %v555 = vmax.f32 %v549, %v550
    %v556 = vmax.f32 %v554, %v555
    %v557 = vrot.slane %v556, 4
    %v558 = vmax.f32 %v556, %v557
    %v559 = vrot.slane %v558, 2
    %v560 = vmax.f32 %v558, %v559
    %v561 = vrot.slane %v560, 1
    %v562 = vmax.f32 %v560, %v561
    %vm563 = vcmask 64519
    %v564 = vsel %vm563, %v436, -inf
    %v565 = vsel %vm450, %v437, -inf
    %v566 = vsel %vm450, %v438, -inf
    %v567 = vsel %vm450, %v439, -inf
    %v568 = vsel %vm450, %v440, -inf
    %v569 = vmax.f32 %v564, %v568
    %vm570 = vcmask 58368
    %v571 = vsel %vm570, %v441, -inf
    %v572 = vmax.f32 %v565, %v571
    %v573 = vmax.f32 %v569, %v572
    %v574 = vmax.f32 %v566, %v567
    %v575 = vmax.f32 %v573, %v574
    %v576 = vrot.slane %v575, 4
    %v577 = vmax.f32 %v575, %v576
    %v578 = vrot.slane %v577, 2
    %v579 = vmax.f32 %v577, %v578
    %v580 = vrot.slane %v579, 1
    %v581 = vmax.f32 %v579, %v580
    %vm582 = vcmask 64514
    %v583 = vsel %vm582, %v441, -inf
    %v584 = vsel %vm450, %v442, -inf
    %v585 = vsel %vm450, %v443, -inf
    %v586 = vsel %vm450, %v444, -inf
    %vm587 = vcmask 61440
    %v588 = vsel %vm587, %v445, -inf
    %v589 = vmax.f32 %v583, %v588
    %v590 = vmax.f32 %v589, %v584
    %v591 = vmax.f32 %v585, %v586
    %v592 = vmax.f32 %v590, %v591
    %v593 = vrot.slane %v592, 4
    %v594 = vmax.f32 %v592, %v593
    %v595 = vrot.slane %v594, 2
    %v596 = vmax.f32 %v594, %v595
    %v597 = vrot.slane %v596, 1
    %v598 = vmax.f32 %v596, %v597
    %vm599 = vcmask 64517
    %v600 = vsel %vm599, %v445, -inf
    %v601 = vsel %vm450, %v446, -inf
    %v602 = vsel %vm450, %v447, -inf
    %v603 = vsel %vm450, %v448, -inf
    %v604 = vsel %vm450, %v449, -inf
    %v605 = vmax.f32 %v600, %v604
    %v606 = vmax.f32 %v605, %v601
    %v607 = vmax.f32 %v602, %v603
    %v608 = vmax.f32 %v606, %v607
    %v609 = vrot.slane %v608, 4
    %v610 = vmax.f32 %v608, %v609
    %v611 = vrot.slane %v610, 2
    %v612 = vmax.f32 %v610, %v611
    %v613 = vrot.slane %v612, 1
    %v614 = vmax.f32 %v612, %v613
    %v615 = vmax.f32 %v562, %v581
    %v616 = vmax.f32 %v598, %v614
    %v617 = vmax.f32 %v615, %v616
    %619 = vrot.lane.b32.xlu0 %v562, 8
    %v620 = vpop.permute.xlu0 %619
    %623 = vrot.lane.b32.xlu0 %v581, 16
    %v624 = vpop.permute.xlu0 %623
    %627 = vrot.lane.b32.xlu0 %v598, 24
    %v628 = vpop.permute.xlu0 %627
    %631 = vrot.lane.b32.xlu0 %v614, 32
    %v632 = vpop.permute.xlu0 %631
    %v634 = vsel %vm450, %v617, %v620
    %v635 = vsel %vm540, %v634, %v624
    %v636 = vsel %vm542, %v635, %v628
    %v637 = vsel %vm544, %v636, %v632
    %v639 = vrot.slane %v637, 7
    %v641 = vsel %vm171, %v545, %v639
    %v642 = vld [vmem:[%s3] sm:$0xff]
    %v643 = vld [vmem:[%s3 + $0x8] sm:$0xff]
    %v644 = vld [vmem:[%s3 + $0x10] sm:$0xff]
    %v645 = vld [vmem:[%s3 + $0x18] sm:$0xff]
    %v646 = vld [vmem:[%s3 + $0x20] sm:$0xff]
    %v647 = vld [vmem:[%s4] sm:$0x1]
    %v649 = vlaneseq
    %v650 = vshrl.u32 %v649, 7
    %v651 = vsub.s32 0, %v650
    %v652 = vrot.slane %v647, %v651
    %vm654 = vcmask 326656
    %v656 = vsel %vm654, %v641, 0
    %658 = vmatprep.subr.mxu0 0.0
    %659 = vmatpush1.msra.mxu0 0.0
    %660 = vmatprep.subr.mxu0 0.0
    %661 = vmatpush1.msra.mxu0 0.0
    %662 = vmatprep.subr.mxu0 0.0
    %663 = vmatpush1.msra.mxu0 0.0
    %664 = vmatprep.subr.mxu0 0.0
    %665 = vmatpush1.msra.mxu0 0.0
    %666 = vmatprep.subr.mxu0 0.0
    %667 = vmatpush1.msra.mxu0 0.0
    %668 = vmatprep.subr.mxu0 0.0
    %669 = vmatpush1.msra.mxu0 0.0
    %670 = vmatprep.subr.mxu0 0.0
    %671 = vmatpush1.msra.mxu0 0.0
    %672 = vmatprep.subr.mxu0 0.0
    %673 = vmatpush1.msra.mxu0 0.0
    %674 = vmatprep.subr.mxu0 0.0
    %675 = vmatpush1.msra.mxu0 0.0
    %676 = vmatprep.subr.mxu0 0.0
    %677 = vmatpush1.msra.mxu0 0.0
    %678 = vmatprep.subr.mxu0 0.0
    %679 = vmatpush1.msra.mxu0 0.0
    %680 = vmatprep.subr.mxu0 0.0
    %681 = vmatpush1.msra.mxu0 %v646
    %682 = vmatprep.subr.mxu0 0.0
    %683 = vmatpush1.msra.mxu0 %v645
    %684 = vmatprep.subr.mxu0 0.0
    %685 = vmatpush1.msra.mxu0 %v644
    %686 = vmatprep.subr.mxu0 0.0
    %687 = vmatpush1.msra.mxu0 %v643
    %688 = vmatprep.subr.mxu0 0.0
    %689 = vmatpush1.msra.mxu0 %v642
    %690 = vmatprep.subr.mxu0 0.0
    %691 = vmatpush2.msra.mxu0 0.0
    %692 = vmatprep.subr.mxu0 0.0
    %693 = vmatpush2.msra.mxu0 0.0
    %694 = vmatprep.subr.mxu0 0.0
    %695 = vmatpush2.msra.mxu0 0.0
    %696 = vmatprep.subr.mxu0 0.0
    %697 = vmatpush2.msra.mxu0 0.0
    %698 = vmatprep.subr.mxu0 0.0
    %699 = vmatpush2.msra.mxu0 0.0
    %700 = vmatprep.subr.mxu0 0.0
    %701 = vmatpush2.msra.mxu0 0.0
    %702 = vmatprep.subr.mxu0 0.0
    %703 = vmatpush2.msra.mxu0 0.0
    %704 = vmatprep.subr.mxu0 0.0
    %705 = vmatpush2.msra.mxu0 0.0
    %706 = vmatprep.subr.mxu0 0.0
    %707 = vmatpush2.msra.mxu0 0.0
    %708 = vmatprep.subr.mxu0 0.0
    %709 = vmatpush2.msra.mxu0 0.0
    %710 = vmatprep.subr.mxu0 0.0
    %711 = vmatpush2.msra.mxu0 0.0
    %712 = vmatprep.subr.mxu0 0.0
    %713 = vmatpush2.msra.mxu0 0.0
    %714 = vmatprep.subr.mxu0 0.0
    %715 = vmatpush2.msra.mxu0 0.0
    %716 = vmatprep.subr.mxu0 0.0
    %717 = vmatpush2.msra.mxu0 0.0
    %718 = vmatprep.subr.mxu0 0.0
    %719 = vmatpush2.msra.mxu0 0.0
    %720 = vmatprep.subr.mxu0 0.0
    %721 = vmatpush2.msra.mxu0 0.0
    %722 = vmatprep.mubr.f32.mxu0 0.0
    %723 = vmatmul.mubr.f32.gmra.mxu0 %v656
    %v724 = vpop.f32.mrf.mxu0
    %v725 = vadd.f32 %v652, %v724
    %v726 = vpop.f32.mrf.mxu0
    %727 = vdwg.mxu0
    %vm728 = vcmask 254976
    %729 = vst.msk [vmem:[#allocation2] sm:$0x3] %vm728, %v725
    // Predicated region
    $region22: #{patient_simi_eval.1} parent=1 // pred_check
      _
    $region23: #{patient_simi_eval.1} parent=1 // pred_check_branch
      %731 = sbr.rel (0) target = $region25
    $region24: #{patient_simi_eval.1} parent=1 // pred_region
      %s733 = ssub.s32 32, 32
      %734 = vsyncadd [#allocation3], %s733
      %s736 = sshll.u32 [#allocation2], 4
      %s737 = int_to_ptr.vmem [resolvable:$true] %s736
      %739 = dma.vmem_to_hbm [thread:$0]  %s737, 32, %s5, [#allocation3]
    $region25: #{patient_simi_eval.1} parent=1 // pred_fallthru
      _
    // Predicated region
    $region26: #{patient_simi_eval.1} parent=1 // pred_check
      _
    $region27: #{patient_simi_eval.1} parent=1 // pred_check_branch
      %741 = sbr.rel (0) target = $region29
    $region28: #{patient_simi_eval.1} parent=1 // pred_region
      %742 = dma.done [#allocation3], 32
    $region29: #{patient_simi_eval.1} parent=1 // pred_fallthru
      _
    %743 = vsyncpa [#allocation3], 1

</llo_original>
